<compile_context>
chip_gen: v7x
topology: tpu7x:2x2x1
jax: 0.10.0
libtpu: 0.0.40
codegen_flags: <defaults>
</compile_context>

<pallas_src>
import functools

import jax
import jax.numpy as jnp
from jax.experimental import pallas as pl
from jax.experimental.pallas import tpu as pltpu

EPS = 1e-4


def _round_up(x, m):
    return ((x + m - 1) // m) * m


# ----------------------------------------------------------------------------
# Fused kernel: predictor + fminf partial sums + smoothness partial sums.
#   Wide layout: column c*K + k corresponds to (cell type c, NCC head k);
#   columns >= C*K are zero padding (column->CT map holds -1 there).
# ----------------------------------------------------------------------------
def _wass_kernel(zdz_ref, ct_ref, yb_ref, inv_ref, w_ref, b_ref,
                 colct_ref, colk_ref,
                 s1_ref, s_ref, g_ref, *, tile_rows):
    tn = tile_rows

    # ONE MXU call: rows [0:tn) of the streamed LHS block are z, rows [tn:2tn)
    # are dz = z1 - z2 (bias cancels in the difference for affine heads).
    res = jnp.dot(zdz_ref[...], w_ref[...], preferred_element_type=jnp.float32)

    # Masks rebuilt in-kernel from 4-byte/row index data (no wide mask streams).
    grp = colct_ref[...] == ct_ref[...]                              # (tn, CKp)
    ybit = jnp.bitwise_and(
        jnp.right_shift(yb_ref[...], colk_ref[...]), 1) > 0          # (tn, CKp)

    def rsum8(a):
        # (tn, CKp) -> (8, CKp) vreg-aligned partial sums: pure VALU adds,
        # the final 8->1 sublane reduce happens once in the JAX epilogue.
        return jnp.sum(a.reshape(tn // 8, 8, a.shape[-1]), axis=0)

    # ---- fminf statistics: per-(CT, head) column sums of masked predictor ----
    xm = jnp.where(grp, res[:tn] + b_ref[...], 0.0)
    s1_ref[...] = rsum8(jnp.where(ybit, xm, 0.0))   # sum x over rows with y=1
    s_ref[...] = rsum8(xm)                          # sum x over all group rows

    # ---- smoothness: t = |f(z1)-f(z2)| / (eps+||z1-z2||), truncated x^2-1 ----
    t = jnp.abs(jnp.where(grp, res[tn:], 0.0)) * inv_ref[...]
    g_ref[...] = rsum8(jnp.maximum(t * t - 1.0, 0.0))


@functools.partial(jax.jit, static_argnames=("tile_rows",))
def wass_forward(z, dz, ct_idx, y01, W, b, *, tile_rows=1024):
    """Returns (loss_fminf, loss_smoothness) as f32 scalars.

    z, dz : [N, D] f32;  ct_idx : [N] int;  y01 : [N, K] in {0,1};
    W : [C, D, K];  b : [C, K].
    """
    N, D = z.shape
    C, _, K = W.shape
    assert K <= 31, "NCC heads are bit-packed into one int32 per row"
    # TODO(synk): for K > 31, pack y into ceil(K/31) int32 columns (not needed here).
    CK = C * K
    CKp = _round_up(CK, 128)                      # lane-dense wide axis

    f32, i32, bf16 = jnp.float32, jnp.int32, jnp.bfloat16

    # ---- row tiling: cap so per-step VMEM fits every generation (v7x: 64 MiB) --
    cap = max(64, min(4096, (8 * 1024 * 1024) // (CKp * 32)))
    tn = max(8, (min(_round_up(N, 8), tile_rows, cap) // 8) * 8)
    npad = _round_up(N, tn)
    ntiles = npad // tn
    pad = npad - N

    # ---- compact per-row side data (12 bytes/row total) ------------------------
    ct_pad = jnp.pad(ct_idx.astype(i32), (0, pad), constant_values=C)   # sentinel
    y_bits = jnp.sum(y01.astype(i32) << jnp.arange(K, dtype=i32)[None, :], axis=1)
    yb_pad = jnp.pad(y_bits.astype(i32), (0, pad))
    inv = 1.0 / (EPS + jnp.sqrt(jnp.sum(dz.astype(f32) ** 2, axis=1)))   # exact f32
    inv_pad = jnp.pad(inv.astype(f32), (0, pad))

    # ---- z and dz interleaved per row-tile -> one streamed bf16 matmul LHS -----
    zt = jnp.pad(z.astype(f32), ((0, pad), (0, 0))).reshape(ntiles, tn, D)
    dzt = jnp.pad(dz.astype(f32), ((0, pad), (0, 0))).reshape(ntiles, tn, D)
    zdz = jnp.concatenate([zt, dzt], axis=1).reshape(2 * npad, D).astype(bf16)

    # ---- resident wide weights / column maps ------------------------------------
    w_wide = jnp.pad(jnp.transpose(W, (1, 0, 2)).reshape(D, CK),
                     ((0, 0), (0, CKp - CK))).astype(bf16)
    b_wide = jnp.pad(jnp.reshape(b, (1, CK)), ((0, 0), (0, CKp - CK))).astype(f32)
    col_ct = jnp.pad(jnp.repeat(jnp.arange(C, dtype=i32), K), (0, CKp - CK),
                     constant_values=-1).reshape(1, CKp)
    col_k = jnp.pad(jnp.tile(jnp.arange(K, dtype=i32), C),
                    (0, CKp - CK)).reshape(1, CKp)

    kernel = functools.partial(_wass_kernel, tile_rows=tn)
    cost = pl.CostEstimate(
        flops=int(2 * (2 * npad) * D * CKp + 12 * npad * CKp),
        transcendentals=0,
        bytes_accessed=int(2 * npad * D * 2 + 12 * npad + D * CKp * 2
                           + 4 * CKp * 4 + 3 * ntiles * 8 * CKp * 4))

    s1_p, s_p, g_p = pl.pallas_call(
        kernel,
        out_shape=(jax.ShapeDtypeStruct((ntiles, 8, CKp), f32),) * 3,
        grid=(ntiles,),
        in_specs=[
            pl.BlockSpec((2 * tn, D), lambda i: (i, 0)),   # z|dz packed (bf16)
            pl.BlockSpec((tn, 1), lambda i: (i, 0)),       # ct index (int32)
            pl.BlockSpec((tn, 1), lambda i: (i, 0)),       # bit-packed y (int32)
            pl.BlockSpec((tn, 1), lambda i: (i, 0)),       # 1/(eps+||dz||) (f32)
            pl.BlockSpec((D, CKp), lambda i: (0, 0)),      # W_wide (bf16, resident)
            pl.BlockSpec((1, CKp), lambda i: (0, 0)),      # bias (f32, resident)
            pl.BlockSpec((1, CKp), lambda i: (0, 0)),      # column -> CT map
            pl.BlockSpec((1, CKp), lambda i: (0, 0)),      # column -> head map
        ],
        out_specs=(
            pl.BlockSpec((None, 8, CKp), lambda i: (i, 0, 0)),
            pl.BlockSpec((None, 8, CKp), lambda i: (i, 0, 0)),
            pl.BlockSpec((None, 8, CKp), lambda i: (i, 0, 0)),
        ),
        compiler_params=pltpu.CompilerParams(
            dimension_semantics=("parallel",),             # v7x: shard across TCs
            vmem_limit_bytes=48 * 1024 * 1024),
        cost_estimate=cost,
    )(zdz, ct_pad.reshape(npad, 1), yb_pad.reshape(npad, 1),
      inv_pad.reshape(npad, 1), w_wide, b_wide, col_ct, col_k)

    # ---- tiny JAX epilogue: finish per-(CT, head) statistics --------------------
    s1 = jnp.sum(s1_p, axis=(0, 1))                # (CKp,) sum x over y=1 rows
    s_tot = jnp.sum(s_p, axis=(0, 1))              # (CKp,) sum x over group rows
    gsum = jnp.sum(g_p, axis=(0, 1))               # (CKp,) smoothness sums

    onehot = jax.nn.one_hot(ct_idx, C, dtype=f32)                       # [N, C]
    n1 = jnp.pad((onehot.T @ y01.astype(f32)).reshape(CK), (0, CKp - CK))
    cnt = jnp.pad(jnp.repeat(jnp.sum(onehot, axis=0), K), (0, CKp - CK))

    s0 = s_tot - s1
    n0 = cnt - n1
    valid = jnp.logical_and(n1 > 0.5, n0 > 0.5)    # both classes => group size >= 2
    loss_fminf = jnp.sum(jnp.where(
        valid, s1 / jnp.maximum(n1, 1.0) - s0 / jnp.maximum(n0, 1.0), 0.0))

    # per group: mean over rows of the per-row head-sum == sum(gsum cols)/count
    loss_smooth = jnp.sum(jnp.where(cnt > 1.5, gsum / jnp.maximum(cnt, 1.0), 0.0))
    return loss_fminf, loss_smooth


# ----------------------------------------------------------------------------
# Plain-JAX glue: within-group random permutations (data-dependent gathers that
# BlockSpec index_maps cannot express).  A single GLOBAL permutation that is
# random within every CT group is built with two argsorts + one scatter; groups
# are disjoint so no per-CT Python loop and no [C, N, D] duplication is needed.
# ----------------------------------------------------------------------------
def _within_group_perm(key, ct_idx):
    n = ct_idx.shape[0]
    base = ct_idx.astype(jnp.float32)
    r = jax.random.uniform(key, (n,), minval=0.0, maxval=0.5)
    frac = 0.5 * jnp.arange(n, dtype=jnp.float32) / float(max(n, 1))
    order_rand = jnp.argsort(base + r)      # grouped by CT, random within group
    order_id = jnp.argsort(base + frac)     # grouped by CT, index order in group
    perm = jnp.zeros((n,), jnp.int32).at[order_id].set(order_rand.astype(jnp.int32))
    return perm                              # identity on singleton groups


def build_dz(key, z, ct_idx):
    n = z.shape[0]
    k1, k2, k3, k4, ku = jax.random.split(key, 5)
    p1 = _within_group_perm(k1, ct_idx)
    p2 = _within_group_perm(k2, ct_idx)
    p3 = _within_group_perm(k3, ct_idx)
    p4 = _within_group_perm(k4, ct_idx)
    u = jax.random.uniform(ku, (n, 1), dtype=jnp.float32)
    zc = z[p1] + u * z[p2]                   # mixed samples within each CT group
    return zc[p3] - zc[p4]                   # z1 - z2  (zero on singleton groups)


# ----------------------------------------------------------------------------
# WassDist forward
# TODO(synk): the real predictorperCT.PredictorPerCT source is not provided; it
# is modeled here as a per-cell-type affine head of matching input/output shape.
# ----------------------------------------------------------------------------
class WassDistPallas:
    def __init__(self, coef_fminf, coef_smoothness, W, b):
        self.coef_fminf = coef_fminf
        self.coef_smoothness = coef_smoothness
        self.W = jnp.asarray(W, jnp.float32)   # [C, D, K]
        self.b = jnp.asarray(b, jnp.float32)   # [C, K]

    def __call__(self, z, ten_CT, ten_NCC, key):
        z = jnp.asarray(z, jnp.float32)
        ct_idx = jnp.argmax(ten_CT, axis=1).astype(jnp.int32)
        y01 = (ten_NCC > 0).astype(jnp.float32)

        dz = build_dz(key, z, ct_idx)
        loss_fminf, loss_smoothness = wass_forward(
            z, dz, ct_idx, y01, self.W, self.b)

        return {
            "loss_fminf": {"val": loss_fminf, "coef": self.coef_fminf},
            "loss_smoothness": {"val": loss_smoothness, "coef": self.coef_smoothness},
        }


if __name__ == "__main__":
    N, D, C, K = 16, 32, 3, 4   # samples, dimZ, num cell types, num NCC heads

    key = jax.random.PRNGKey(0)
    kz, kct, kncc, kw, kb, ksmooth = jax.random.split(key, 6)

    z = jax.random.normal(kz, (N, D), dtype=jnp.float32)
    ct_idx = jax.random.randint(kct, (N,), 0, C)
    ten_CT = jax.nn.one_hot(ct_idx, C, dtype=jnp.float32)
    ten_NCC = jax.random.normal(kncc, (N, K), dtype=jnp.float32)

    # deterministic synthetic predictor parameters
    W = 0.1 * jax.random.normal(kw, (C, D, K), dtype=jnp.float32)
    b = 0.01 * jax.random.normal(kb, (C, K), dtype=jnp.float32)

    wass = WassDistPallas(coef_fminf=1.0, coef_smoothness=0.5, W=W, b=b)
    out = wass(z, ten_CT, ten_NCC, ksmooth)

    jax.block_until_ready(out["loss_fminf"]["val"])
    jax.block_until_ready(out["loss_smoothness"]["val"])
    print("KERNEL_OK")
</pallas_src>

<mosaic_0001>
module attributes {stable_mosaic.version = 11 : i64} {
  func.func @_wass_kernel(%arg0: i32, %arg1: memref<32x32xbf16, #tpu.memory_space<vmem>>, %arg2: memref<16x1xi32, #tpu.memory_space<vmem>>, %arg3: memref<16x1xi32, #tpu.memory_space<vmem>>, %arg4: memref<16x1xf32, #tpu.memory_space<vmem>>, %arg5: memref<32x128xbf16, #tpu.memory_space<vmem>>, %arg6: memref<1x128xf32, #tpu.memory_space<vmem>>, %arg7: memref<1x128xi32, #tpu.memory_space<vmem>>, %arg8: memref<1x128xi32, #tpu.memory_space<vmem>>, %arg9: memref<1x8x128xf32, #tpu.memory_space<vmem>>, %arg10: memref<1x8x128xf32, #tpu.memory_space<vmem>>, %arg11: memref<1x8x128xf32, #tpu.memory_space<vmem>>) attributes {dimension_semantics = [#tpu.dimension_semantics<parallel>], iteration_bounds = array<i64: 1>, scalar_prefetch = 0 : i64, scratch_operands = 0 : i64, tpu.core_type = #tpu.core_type<tc>, window_params = [{transform_indices = @transform_0, window_bounds = array<i64: 32, 32>}, {transform_indices = @transform_1, window_bounds = array<i64: 16, 1>}, {transform_indices = @transform_2, window_bounds = array<i64: 16, 1>}, {transform_indices = @transform_3, window_bounds = array<i64: 16, 1>}, {pipeline_mode = #tpu.pipeline_mode<synchronous>, transform_indices = @transform_4, window_bounds = array<i64: 32, 128>}, {pipeline_mode = #tpu.pipeline_mode<synchronous>, transform_indices = @transform_5, window_bounds = array<i64: 1, 128>}, {pipeline_mode = #tpu.pipeline_mode<synchronous>, transform_indices = @transform_6, window_bounds = array<i64: 1, 128>}, {pipeline_mode = #tpu.pipeline_mode<synchronous>, transform_indices = @transform_7, window_bounds = array<i64: 1, 128>}, {transform_indices = @transform_8, window_bounds = array<i64: 1, 8, 128>}, {transform_indices = @transform_9, window_bounds = array<i64: 1, 8, 128>}, {transform_indices = @transform_10, window_bounds = array<i64: 1, 8, 128>}]} {
    %c0 = arith.constant 0 : index
    %c0_0 = arith.constant 0 : index
    %0 = vector.load %arg1[%c0, %c0_0] : memref<32x32xbf16, #tpu.memory_space<vmem>>, vector<32x32xbf16>
    %c0_1 = arith.constant 0 : index
    %c0_2 = arith.constant 0 : index
    %1 = vector.load %arg5[%c0_1, %c0_2] : memref<32x128xbf16, #tpu.memory_space<vmem>>, vector<32x128xbf16>
    %cst = arith.constant dense<0.000000e+00> : vector<32x128xf32>
    %2 = tpu.matmul %0, %1, %cst {dimension_numbers = #tpu.dot_dimension_numbers<[1], [0], [0], [1], [0, 0, 1, 1], [], []>} : vector<32x32xbf16>, vector<32x128xbf16>, vector<32x128xf32> -> vector<32x128xf32>
    %c0_3 = arith.constant 0 : index
    %c0_4 = arith.constant 0 : index
    %3 = vector.load %arg7[%c0_3, %c0_4] : memref<1x128xi32, #tpu.memory_space<vmem>>, vector<1x128xi32>
    %c0_5 = arith.constant 0 : index
    %c0_6 = arith.constant 0 : index
    %4 = vector.load %arg2[%c0_5, %c0_6] : memref<16x1xi32, #tpu.memory_space<vmem>>, vector<16x1xi32>
    %5 = vector.broadcast %3 : vector<1x128xi32> to vector<16x128xi32>
    %6 = vector.broadcast %4 : vector<16x1xi32> to vector<16x128xi32>
    %7 = arith.cmpi eq, %5, %6 : vector<16x128xi32>
    %c0_7 = arith.constant 0 : index
    %c0_8 = arith.constant 0 : index
    %8 = vector.load %arg3[%c0_7, %c0_8] : memref<16x1xi32, #tpu.memory_space<vmem>>, vector<16x1xi32>
    %c0_9 = arith.constant 0 : index
    %c0_10 = arith.constant 0 : index
    %9 = vector.load %arg8[%c0_9, %c0_10] : memref<1x128xi32, #tpu.memory_space<vmem>>, vector<1x128xi32>
    %10 = vector.broadcast %8 : vector<16x1xi32> to vector<16x128xi32>
    %11 = vector.broadcast %9 : vector<1x128xi32> to vector<16x128xi32>
    %12 = arith.shrsi %10, %11 : vector<16x128xi32>
    %c1_i32 = arith.constant 1 : i32
    %13 = vector.broadcast %c1_i32 : i32 to vector<16x128xi32>
    %14 = arith.andi %12, %13 : vector<16x128xi32>
    %c0_i32 = arith.constant 0 : i32
    %15 = vector.broadcast %c0_i32 : i32 to vector<16x128xi32>
    %16 = arith.cmpi sgt, %14, %15 : vector<16x128xi32>
    %17 = vector.extract_strided_slice %2 {offsets = [0, 0], sizes = [16, 128], strides = [1, 1]} : vector<32x128xf32> to vector<16x128xf32>
    %c0_11 = arith.constant 0 : index
    %c0_12 = arith.constant 0 : index
    %18 = vector.load %arg6[%c0_11, %c0_12] : memref<1x128xf32, #tpu.memory_space<vmem>>, vector<1x128xf32>
    %19 = vector.broadcast %18 : vector<1x128xf32> to vector<16x128xf32>
    %20 = arith.addf %17, %19 : vector<16x128xf32>
    %cst_13 = arith.constant 0.000000e+00 : f32
    %21 = vector.broadcast %cst_13 : f32 to vector<16x128xf32>
    %22 = arith.select %7, %20, %21 : vector<16x128xi1>, vector<16x128xf32>
    %cst_14 = arith.constant 0.000000e+00 : f32
    %23 = vector.broadcast %cst_14 : f32 to vector<16x128xf32>
    %24 = arith.select %16, %22, %23 : vector<16x128xi1>, vector<16x128xf32>
    %25 = vector.shape_cast %24 : vector<16x128xf32> to vector<2x8x128xf32>
    %cst_15 = arith.constant dense<0.000000e+00> : vector<8x128xf32>
    %26 = vector.multi_reduction <add>, %25, %cst_15 [0] : vector<2x8x128xf32> to vector<8x128xf32>
    %c0_16 = arith.constant 0 : index
    %c0_17 = arith.constant 0 : index
    %c0_18 = arith.constant 0 : index
    %27 = vector.load %arg9[%c0_16, %c0_17, %c0_18] : memref<1x8x128xf32, #tpu.memory_space<vmem>>, vector<1x8x128xf32>
    %28 = vector.shape_cast %27 : vector<1x8x128xf32> to vector<8x128xf32>
    %29 = vector.shape_cast %26 : vector<8x128xf32> to vector<1x8x128xf32>
    tpu.vector_store %arg9[%c0_16, %c0_17, %c0_18], %29 {strides = array<i32>} : memref<1x8x128xf32, #tpu.memory_space<vmem>>, vector<1x8x128xf32>,
    %30 = vector.shape_cast %22 : vector<16x128xf32> to vector<2x8x128xf32>
    %cst_19 = arith.constant dense<0.000000e+00> : vector<8x128xf32>
    %31 = vector.multi_reduction <add>, %30, %cst_19 [0] : vector<2x8x128xf32> to vector<8x128xf32>
    %c0_20 = arith.constant 0 : index
    %c0_21 = arith.constant 0 : index
    %c0_22 = arith.constant 0 : index
    %32 = vector.load %arg10[%c0_20, %c0_21, %c0_22] : memref<1x8x128xf32, #tpu.memory_space<vmem>>, vector<1x8x128xf32>
    %33 = vector.shape_cast %32 : vector<1x8x128xf32> to vector<8x128xf32>
    %34 = vector.shape_cast %31 : vector<8x128xf32> to vector<1x8x128xf32>
    tpu.vector_store %arg10[%c0_20, %c0_21, %c0_22], %34 {strides = array<i32>} : memref<1x8x128xf32, #tpu.memory_space<vmem>>, vector<1x8x128xf32>,
    %35 = vector.extract_strided_slice %2 {offsets = [16, 0], sizes = [16, 128], strides = [1, 1]} : vector<32x128xf32> to vector<16x128xf32>
    %cst_23 = arith.constant 0.000000e+00 : f32
    %36 = vector.broadcast %cst_23 : f32 to vector<16x128xf32>
    %37 = arith.select %7, %35, %36 : vector<16x128xi1>, vector<16x128xf32>
    %38 = math.absf %37 : vector<16x128xf32>
    %c0_24 = arith.constant 0 : index
    %c0_25 = arith.constant 0 : index
    %39 = vector.load %arg4[%c0_24, %c0_25] : memref<16x1xf32, #tpu.memory_space<vmem>>, vector<16x1xf32>
    %40 = vector.broadcast %39 : vector<16x1xf32> to vector<16x128xf32>
    %41 = arith.mulf %38, %40 : vector<16x128xf32>
    %42 = arith.mulf %41, %41 : vector<16x128xf32>
    %cst_26 = arith.constant 1.000000e+00 : f32
    %43 = vector.broadcast %cst_26 : f32 to vector<16x128xf32>
    %44 = arith.subf %42, %43 : vector<16x128xf32>
    %cst_27 = arith.constant 0.000000e+00 : f32
    %45 = vector.broadcast %cst_27 : f32 to vector<16x128xf32>
    %46 = arith.maximumf %44, %45 : vector<16x128xf32>
    %47 = vector.shape_cast %46 : vector<16x128xf32> to vector<2x8x128xf32>
    %cst_28 = arith.constant dense<0.000000e+00> : vector<8x128xf32>
    %48 = vector.multi_reduction <add>, %47, %cst_28 [0] : vector<2x8x128xf32> to vector<8x128xf32>
    %c0_29 = arith.constant 0 : index
    %c0_30 = arith.constant 0 : index
    %c0_31 = arith.constant 0 : index
    %49 = vector.load %arg11[%c0_29, %c0_30, %c0_31] : memref<1x8x128xf32, #tpu.memory_space<vmem>>, vector<1x8x128xf32>
    %50 = vector.shape_cast %49 : vector<1x8x128xf32> to vector<8x128xf32>
    %51 = vector.shape_cast %48 : vector<8x128xf32> to vector<1x8x128xf32>
    tpu.vector_store %arg11[%c0_29, %c0_30, %c0_31], %51 {strides = array<i32>} : memref<1x8x128xf32, #tpu.memory_space<vmem>>, vector<1x8x128xf32>,
    return
  }
  func.func @transform_0(%arg0: i32) -> (i32, i32) {
    %c0_i32 = arith.constant 0 : i32
    %c0_i32_0 = arith.constant 0 : i32
    return %arg0, %c0_i32 : i32, i32
  }
  func.func @transform_1(%arg0: i32) -> (i32, i32) {
    %c0_i32 = arith.constant 0 : i32
    %c0_i32_0 = arith.constant 0 : i32
    return %arg0, %c0_i32 : i32, i32
  }
  func.func @transform_2(%arg0: i32) -> (i32, i32) {
    %c0_i32 = arith.constant 0 : i32
    %c0_i32_0 = arith.constant 0 : i32
    return %arg0, %c0_i32 : i32, i32
  }
  func.func @transform_3(%arg0: i32) -> (i32, i32) {
    %c0_i32 = arith.constant 0 : i32
    %c0_i32_0 = arith.constant 0 : i32
    return %arg0, %c0_i32 : i32, i32
  }
  func.func @transform_4(%arg0: i32) -> (i32, i32) {
    %c0_i32 = arith.constant 0 : i32
    %c0_i32_0 = arith.constant 0 : i32
    %c0_i32_1 = arith.constant 0 : i32
    return %c0_i32, %c0_i32_0 : i32, i32
  }
  func.func @transform_5(%arg0: i32) -> (i32, i32) {
    %c0_i32 = arith.constant 0 : i32
    %c0_i32_0 = arith.constant 0 : i32
    %c0_i32_1 = arith.constant 0 : i32
    return %c0_i32, %c0_i32_0 : i32, i32
  }
  func.func @transform_6(%arg0: i32) -> (i32, i32) {
    %c0_i32 = arith.constant 0 : i32
    %c0_i32_0 = arith.constant 0 : i32
    %c0_i32_1 = arith.constant 0 : i32
    return %c0_i32, %c0_i32_0 : i32, i32
  }
  func.func @transform_7(%arg0: i32) -> (i32, i32) {
    %c0_i32 = arith.constant 0 : i32
    %c0_i32_0 = arith.constant 0 : i32
    %c0_i32_1 = arith.constant 0 : i32
    return %c0_i32, %c0_i32_0 : i32, i32
  }
  func.func @transform_8(%arg0: i32) -> (i32, i32, i32) {
    %c0_i32 = arith.constant 0 : i32
    %c0_i32_0 = arith.constant 0 : i32
    %c0_i32_1 = arith.constant 0 : i32
    return %arg0, %c0_i32, %c0_i32_0 : i32, i32, i32
  }
  func.func @transform_9(%arg0: i32) -> (i32, i32, i32) {
    %c0_i32 = arith.constant 0 : i32
    %c0_i32_0 = arith.constant 0 : i32
    %c0_i32_1 = arith.constant 0 : i32
    return %arg0, %c0_i32, %c0_i32_0 : i32, i32, i32
  }
  func.func @transform_10(%arg0: i32) -> (i32, i32, i32) {
    %c0_i32 = arith.constant 0 : i32
    %c0_i32_0 = arith.constant 0 : i32
    %c0_i32_1 = arith.constant 0 : i32
    return %arg0, %c0_i32, %c0_i32_0 : i32, i32, i32
  }
}

</mosaic_0001>

<llo_original>
// kernel: wass_forward.1
$region0: #{wass_forward.1}
  #allocation0 [shape = 'u32[]', space=smem, size = 0x4, offset = 0x4, fixed_abs, tag = 'smem constant byte address 0x4 - core index']
  #allocation1 [shape = 'u32[144,128]{1,0:T(1,128)}', space=vmem, size = 0x12000, scoped, tag = 'internal scratch']
  %s0 = inlined_call_operand.vmem [shape: bf16[32,32], index: 0, kind: input, shape index: {}]
  %s1 = inlined_call_operand.vmem [shape: s32[16,1], index: 1, kind: input, shape index: {}]
  %s2 = inlined_call_operand.vmem [shape: s32[16,1], index: 2, kind: input, shape index: {}]
  %s3 = inlined_call_operand.vmem [shape: f32[16,1], index: 3, kind: input, shape index: {}]
  %s4 = inlined_call_operand.vmem [shape: bf16[32,128], index: 4, kind: input, shape index: {}]
  %s5 = inlined_call_operand.vmem [shape: f32[1,128], index: 5, kind: input, shape index: {}]
  %s6 = inlined_call_operand.vmem [shape: s32[1,128], index: 6, kind: input, shape index: {}]
  %s7 = inlined_call_operand.vmem [shape: s32[1,128], index: 7, kind: input, shape index: {}]
  %s8 = inlined_call_operand.vmem [shape: f32[1,8,128], index: 8, kind: output, shape index: {0}]
  %s9 = inlined_call_operand.vmem [shape: f32[1,8,128], index: 9, kind: output, shape index: {1}]
  %s10 = inlined_call_operand.vmem [shape: f32[1,8,128], index: 10, kind: output, shape index: {2}]
  %11 = xla_tuple %s8, %s9, %s10
  %s12 = sld [smem:[#allocation0]]
  $region58: #{wass_forward.1} parent=0
    _
  %s14 = ssub.s32 1, %s12
  %s15 = scalar_select 0, %s14, %s12
  // Predicated region
  $region2: #{wass_forward.1} parent=0 // pred_check
    _
  $region3: #{wass_forward.1} parent=0 // pred_check_branch
    %17 = sbr.rel (0) target = $region5
  $region4: #{wass_forward.1} parent=0 // pred_region
    _
  $region5: #{wass_forward.1} parent=0 // pred_fallthru
    _
  // Predicated region
  $region6: #{wass_forward.1} parent=0 // pred_check
    _
  $region7: #{wass_forward.1} parent=0 // pred_check_branch
    %19 = sbr.rel (0) target = $region9
  $region8: #{wass_forward.1} parent=0 // pred_region
    _
  $region9: #{wass_forward.1} parent=0 // pred_fallthru
    _
  // Predicated region
  $region10: #{wass_forward.1} parent=0 // pred_check
    _
  $region11: #{wass_forward.1} parent=0 // pred_check_branch
    %21 = sbr.rel (0) target = $region13
  $region12: #{wass_forward.1} parent=0 // pred_region
    _
  $region13: #{wass_forward.1} parent=0 // pred_fallthru
    _
  // Predicated region
  $region14: #{wass_forward.1} parent=0 // pred_check
    _
  $region15: #{wass_forward.1} parent=0 // pred_check_branch
    %23 = sbr.rel (0) target = $region17
  $region16: #{wass_forward.1} parent=0 // pred_region
    _
  $region17: #{wass_forward.1} parent=0 // pred_fallthru
    _
  // Predicated region
  $region18: #{wass_forward.1} parent=0 // pred_check
    _
  $region19: #{wass_forward.1} parent=0 // pred_check_branch
    %25 = sbr.rel (0) target = $region21
  $region20: #{wass_forward.1} parent=0 // pred_region
    _
  $region21: #{wass_forward.1} parent=0 // pred_fallthru
    _
  // Predicated region
  $region22: #{wass_forward.1} parent=0 // pred_check
    _
  $region23: #{wass_forward.1} parent=0 // pred_check_branch
    %27 = sbr.rel (0) target = $region25
  $region24: #{wass_forward.1} parent=0 // pred_region
    _
  $region25: #{wass_forward.1} parent=0 // pred_fallthru
    _
  // Predicated region
  $region26: #{wass_forward.1} parent=0 // pred_check
    _
  $region27: #{wass_forward.1} parent=0 // pred_check_branch
    %29 = sbr.rel (0) target = $region29
  $region28: #{wass_forward.1} parent=0 // pred_region
    _
  $region29: #{wass_forward.1} parent=0 // pred_fallthru
    _
  // Predicated region
  $region30: #{wass_forward.1} parent=0 // pred_check
    _
  $region31: #{wass_forward.1} parent=0 // pred_check_branch
    %31 = sbr.rel (0) target = $region33
  $region32: #{wass_forward.1} parent=0 // pred_region
    _
  $region33: #{wass_forward.1} parent=0 // pred_fallthru
    _
  %v33 = vld [vmem:[%s0] sm:$0xf]
  %v34 = vld [vmem:[%s0 + $0x4] sm:$0xf]
  %v35 = vld [vmem:[%s0 + $0x8] sm:$0xf]
  %v36 = vld [vmem:[%s0 + $0xc] sm:$0xf]
  %v37 = vld [vmem:[%s4] sm:$0xf]
  %v38 = vld [vmem:[%s4 + $0x4] sm:$0xf]
  %v39 = vld [vmem:[%s4 + $0x8] sm:$0xf]
  %v40 = vld [vmem:[%s4 + $0xc] sm:$0xf]
  %v45 = vunpack.c.l.b16 %v33
  %v46 = vunpack.c.l.b16 %v34
  %v47 = vunpack.c.l.b16 %v35
  %v48 = vunpack.c.l.b16 %v36
  %v49 = vpack.c.b16 %v46, %v45
  %v50 = vpack.c.b16 %v48, %v47
  %v55 = vunpack.c.l.b16 %v37
  %v56 = vunpack.c.l.b16 %v38
  %v57 = vunpack.c.l.b16 %v39
  %v58 = vunpack.c.l.b16 %v40
  %v59 = vpack.c.b16 %v56, %v55
  %v60 = vpack.c.b16 %v58, %v57
  %vm63 = vcmask 261120
  %v65 = vsel %vm63, %v49, 0
  %v68 = vsel %vm63, %v50, 0
  %70 = vmatprep.subr.bf16.mxu0 0
  %71 = vmatpush1.bf16.msra.mxu0 %v59
  %72 = vmatprep.subr.bf16.mxu0 0
  %73 = vmatpush1.bf16.msra.mxu0 %v60
  %74 = vmatprep.subr.bf16.mxu0 0
  %75 = vmatpush1.bf16.msra.mxu0 0
  %76 = vmatprep.subr.bf16.mxu0 0
  %77 = vmatpush1.bf16.msra.mxu0 0
  %78 = vmatprep.subr.bf16.mxu0 0
  %79 = vmatpush1.bf16.msra.mxu0 0
  %80 = vmatprep.subr.bf16.mxu0 0
  %81 = vmatpush1.bf16.msra.mxu0 0
  %82 = vmatprep.subr.bf16.mxu0 0
  %83 = vmatpush1.bf16.msra.mxu0 0
  %84 = vmatprep.subr.bf16.mxu0 0
  %85 = vmatpush1.bf16.msra.mxu0 0
  %86 = vmatprep.subr.bf16.mxu0 0
  %87 = vmatpush1.bf16.msra.mxu0 0
  %88 = vmatprep.subr.bf16.mxu0 0
  %89 = vmatpush1.bf16.msra.mxu0 0
  %90 = vmatprep.subr.bf16.mxu0 0
  %91 = vmatpush1.bf16.msra.mxu0 0
  %92 = vmatprep.subr.bf16.mxu0 0
  %93 = vmatpush1.bf16.msra.mxu0 0
  %94 = vmatprep.subr.bf16.mxu0 0
  %95 = vmatpush1.bf16.msra.mxu0 0
  %96 = vmatprep.subr.bf16.mxu0 0
  %97 = vmatpush1.bf16.msra.mxu0 0
  %98 = vmatprep.subr.bf16.mxu0 0
  %99 = vmatpush1.bf16.msra.mxu0 0
  %100 = vmatprep.subr.bf16.mxu0 0
  %101 = vmatpush1.bf16.msra.mxu0 0
  %102 = vmatprep.mubr.bf16.mxu0 0
  %103 = vmatmul.mubr.bf16.gmra.mrb[0].mxu0 %v65
  %v104 = vpop.f32.mrb[0].mxu0
  %v105 = vadd.f32 0.0, %v104
  %v106 = vpop.f32.mrb[0].mxu0
  %v107 = vpop.f32.mrb[0].mxu0
  %v108 = vadd.f32 0.0, %v107
  %v109 = vpop.f32.mrb[0].mxu0
  %110 = vmatprep.mubr.bf16.mxu0 0
  %111 = vmatmul.mubr.bf16.gmra.mrb[0].mxu0 %v68
  %v112 = vpop.f32.mrb[0].mxu0
  %v113 = vadd.f32 0.0, %v112
  %v114 = vpop.f32.mrb[0].mxu0
  %v115 = vpop.f32.mrb[0].mxu0
  %v116 = vadd.f32 0.0, %v115
  %v117 = vpop.f32.mrb[0].mxu0
  %118 = vdwg.mxu0
  %v119 = vld [vmem:[%s6] sm:$0x1]
  %v120 = vld [vmem:[%s1] sm:$0xff]
  %v121 = vld [vmem:[%s1 + $0x8] sm:$0xff]
  %v122 = vlaneseq
  %v123 = vshrl.u32 %v122, 7
  %v124 = vsub.s32 0, %v123
  %v125 = vrot.slane %v119, %v124
  %126 = vset.pattern.permute.xlu0 0
  %127 = vperm.xlu0 %126, %v120
  %v128 = vpop.permute.xlu0 %127
  %129 = vset.pattern.permute.xlu0 0
  %130 = vperm.xlu0 %129, %v121
  %v131 = vpop.permute.xlu0 %130
  %vm132 = vcmp.eq.s32.totalorder %v125, %v128
  %vm133 = vcmp.eq.s32.totalorder %v125, %v131
  %v134 = vld [vmem:[%s2] sm:$0xff]
  %v135 = vld [vmem:[%s2 + $0x8] sm:$0xff]
  %v136 = vld [vmem:[%s7] sm:$0x1]
  %137 = vset.pattern.permute.xlu0 0
  %138 = vperm.xlu0 %137, %v134
  %v139 = vpop.permute.xlu0 %138
  %140 = vset.pattern.permute.xlu0 0
  %141 = vperm.xlu0 %140, %v135
  %v142 = vpop.permute.xlu0 %141
  %v143 = vlaneseq
  %v144 = vshrl.u32 %v143, 7
  %v145 = vsub.s32 0, %v144
  %v146 = vrot.slane %v136, %v145
  %v147 = vshra.s32 %v139, %v146
  %v148 = vshra.s32 %v142, %v146
  %v149 = vand.u32 %v147, 1
  %v150 = vand.u32 %v148, 1
  %vm151 = vcmp.gt.s32.totalorder %v149, 0
  %vm152 = vcmp.gt.s32.totalorder %v150, 0
  %v153 = vld [vmem:[%s5] sm:$0x1]
  %v155 = vlaneseq
  %v156 = vshrl.u32 %v155, 7
  %v157 = vsub.s32 0, %v156
  %v158 = vrot.slane %v153, %v157
  %v160 = vadd.f32 %v105, %v158
  %v161 = vadd.f32 %v108, %v158
  %v162 = vsel %vm132, %v160, 0.0
  %v163 = vsel %vm133, %v161, 0.0
  %v164 = vsel %vm151, %v162, 0.0
  %v165 = vsel %vm152, %v163, 0.0
  %v166 = vadd.f32 %v164, %v165
  %167 = vst [vmem:[%s8] sm:$0xff] %v166
  %v168 = vadd.f32 %v162, %v163
  %169 = vst [vmem:[%s9] sm:$0xff] %v168
  %v170 = vsel %vm132, %v113, 0.0
  %v171 = vsel %vm133, %v116, 0.0
  %v172 = vand.u32 2147483647, %v170
  %v173 = vand.u32 2147483647, %v171
  %v174 = vld [vmem:[%s3] sm:$0xff]
  %v175 = vld [vmem:[%s3 + $0x8] sm:$0xff]
  %177 = vset.pattern.permute.xlu0 0
  %178 = vperm.xlu0 %177, %v174
  %v179 = vpop.permute.xlu0 %178
  %182 = vset.pattern.permute.xlu0 0
  %183 = vperm.xlu0 %182, %v175
  %v184 = vpop.permute.xlu0 %183
  %v186 = vmul.f32 %v172, %v179
  %v187 = vmul.f32 %v173, %v184
  %v188 = vmul.f32 %v186, %v186
  %v189 = vmul.f32 %v187, %v187
  %v190 = vsub.f32 %v188, 1.0
  %v191 = vsub.f32 %v189, 1.0
  %v192 = vmax.f32 %v190, 0.0
  %v193 = vmax.f32 %v191, 0.0
  %v194 = vadd.f32 %v192, %v193
  %195 = vst [vmem:[%s10] sm:$0xff] %v194
  // Predicated region
  $region34: #{wass_forward.1} parent=0 // pred_check
    _
  $region35: #{wass_forward.1} parent=0 // pred_check_branch
    %197 = sbr.rel (0) target = $region37
  $region36: #{wass_forward.1} parent=0 // pred_region
    _
  $region37: #{wass_forward.1} parent=0 // pred_fallthru
    _
  // Predicated region
  $region38: #{wass_forward.1} parent=0 // pred_check
    _
  $region39: #{wass_forward.1} parent=0 // pred_check_branch
    %199 = sbr.rel (0) target = $region41
  $region40: #{wass_forward.1} parent=0 // pred_region
    _
  $region41: #{wass_forward.1} parent=0 // pred_fallthru
    _
  // Predicated region
  $region42: #{wass_forward.1} parent=0 // pred_check
    _
  $region43: #{wass_forward.1} parent=0 // pred_check_branch
    %201 = sbr.rel (0) target = $region45
  $region44: #{wass_forward.1} parent=0 // pred_region
    _
  $region45: #{wass_forward.1} parent=0 // pred_fallthru
    _
  // Predicated region
  $region46: #{wass_forward.1} parent=0 // pred_check
    _
  $region47: #{wass_forward.1} parent=0 // pred_check_branch
    %203 = sbr.rel (0) target = $region49
  $region48: #{wass_forward.1} parent=0 // pred_region
    _
  $region49: #{wass_forward.1} parent=0 // pred_fallthru
    _
  // Predicated region
  $region50: #{wass_forward.1} parent=0 // pred_check
    _
  $region51: #{wass_forward.1} parent=0 // pred_check_branch
    %205 = sbr.rel (0) target = $region53
  $region52: #{wass_forward.1} parent=0 // pred_region
    _
  $region53: #{wass_forward.1} parent=0 // pred_fallthru
    _
  // Predicated region
  $region54: #{wass_forward.1} parent=0 // pred_check
    _
  $region55: #{wass_forward.1} parent=0 // pred_check_branch
    %207 = sbr.rel (0) target = $region57
  $region56: #{wass_forward.1} parent=0 // pred_region
    _
  $region57: #{wass_forward.1} parent=0 // pred_fallthru
    _

</llo_original>
